<compile_context>
chip_gen: v7x
topology: tpu7x:2x2x1
jax: 0.10.0
libtpu: 0.0.40
codegen_flags: <defaults>
</compile_context>

<pallas_src>
import jax
import jax.numpy as jnp
from jax.experimental import pallas as pl
from jax.experimental.pallas import tpu as pltpu


def _round_up(x, m):
    return ((x + m - 1) // m) * m


def _pick_tile_b(B, cap=512):
    """Pick the batch tile.

    - B < 8: a single block whose sublane dim equals the full batch (allowed).
    - Mid-size B: split into two 8-aligned tiles when each half is >=128 rows so
      the "parallel" batch axis actually shards across both v7x TensorCores.
    - Large B: fixed 512-row tile (multiple of 16 for bf16 packing) to amortize
      the ~0.35us per-grid-step overhead and keep HBM streaming efficient.
    Never returns a tile larger than B (avoids blocks bigger than the array);
    a non-dividing tile just yields a ragged last block.
    """
    if B < 8:
        return B
    if B <= cap and B % 16 == 0 and B // 2 >= 128:
        return B // 2
    return min(cap, (B // 8) * 8)


# ----------------------------- Pallas kernel --------------------------------
def classifier_kernel(x_ref, w_ref, b_ref, o_ref):
    """o = x @ W_t + b with f32 MXU accumulation.

    x_ref: (tile_b, H) bf16   w_ref: (H, L) bf16 (pre-transposed, VMEM-resident)
    b_ref: (1, L) f32         o_ref: (tile_b, L) f32
    """
    acc = jnp.dot(x_ref[...], w_ref[...], preferred_element_type=jnp.float32)
    o_ref[...] = (acc + b_ref[...]).astype(o_ref.dtype)


# ------------------------ one-time parameter prep ----------------------------
def prepare_classifier_params(weight, bias):
    """Init-time prep of nn.Linear(H, L) params (NOT in the per-call forward path).

    weight: (L, H) f32 PyTorch layout -> (H, L) bf16 (pre-transposed so the kernel
            needs no per-grid-step transpose of the resident weight tile).
    bias:   (L,) f32 -> (1, L) f32 (bias add / epilogue stays in f32).
    """
    w_t = jnp.asarray(weight).T.astype(jnp.bfloat16)            # (H, L) bf16
    b2 = jnp.asarray(bias, dtype=jnp.float32).reshape(1, -1)    # (1, L) f32
    return w_t, b2


# ------------------------------ forward pass ---------------------------------
def classifier_forward(feats, w_t, b2, *, tile_b=None):
    """feats: (B, H) bf16 (encoder output), w_t: (H, L) bf16, b2: (1, L) f32.

    Returns logits (B, L) f32.
    """
    if feats.dtype != jnp.bfloat16:
        # Fallback only; the encoder should emit bf16 directly (no extra HBM pass).
        feats = feats.astype(jnp.bfloat16)
    B, H = feats.shape
    L = w_t.shape[1]

    if tile_b is None:
        tile_b = _pick_tile_b(B)

    grid = (pl.cdiv(B, tile_b),)   # ragged last block; OOB output rows masked on write

    return pl.pallas_call(
        classifier_kernel,
        out_shape=jax.ShapeDtypeStruct((B, L), jnp.float32),
        grid_spec=pltpu.PrefetchScalarGridSpec(
            num_scalar_prefetch=0,
            grid=grid,
            in_specs=[
                pl.BlockSpec((tile_b, H), lambda i: (i, 0)),  # streaming bf16 feats tiles
                pl.BlockSpec((H, L), lambda i: (0, 0)),       # resident weight (H*L bf16)
                pl.BlockSpec((1, L), lambda i: (0, 0)),       # resident bias
            ],
            out_specs=pl.BlockSpec((tile_b, L), lambda i: (i, 0)),
        ),
        compiler_params=pltpu.CompilerParams(
            dimension_semantics=("parallel",)),
    )(feats, w_t, b2)


# --------------------- frozen encoder stand-in (plain JAX) -------------------
def fake_encode_text(token_ids, embed_table, proj_w):
    """Deterministic stand-in for pretrained_model.encode_text (frozen, no grad).

    token_ids:   (B, S) int32
    embed_table: (V, E) f32
    proj_w:      (E, H) f32
    returns:     (B, H) bf16 text features — emitted in bf16 so the classifier
                 head streams bf16 from HBM with no wrapper-side cast pass.
    """
    emb = jnp.take(embed_table, token_ids, axis=0)   # (B, S, E)
    pooled = emb.mean(axis=1)                        # (B, E)
    return (pooled @ proj_w).astype(jnp.bfloat16)    # (B, H) bf16 (fused epilogue cast)


# ---------------------------------- main -------------------------------------
if __name__ == "__main__":
    # Small shapes consistent with the module: hidden_size = CFG.projection_dim.
    B, S, V, E = 8, 16, 100, 128      # batch, seq len, vocab, encoder width
    H, L = 256, 2                     # projection_dim (hidden_size), num_labels

    key = jax.random.PRNGKey(0)
    k_tok, k_emb, k_proj, k_w, k_b = jax.random.split(key, 5)

    # "inputs": tokenized texts (deterministic).
    token_ids = jax.random.randint(k_tok, (B, S), 0, V, dtype=jnp.int32)

    # Frozen pretrained-encoder stand-in parameters.
    embed_table = jax.random.normal(k_emb, (V, E), dtype=jnp.float32) * 0.02
    proj_w = jax.random.normal(k_proj, (E, H), dtype=jnp.float32) * (1.0 / jnp.sqrt(E))

    # Classifier = nn.Linear(hidden_size, num_labels): weight (L, H), bias (L,)
    # PyTorch default init: U(-1/sqrt(H), 1/sqrt(H)).
    bound = 1.0 / float(jnp.sqrt(jnp.float32(H)))
    cls_w = jax.random.uniform(k_w, (L, H), jnp.float32, -bound, bound)
    cls_b = jax.random.uniform(k_b, (L,), jnp.float32, -bound, bound)

    # One-time parameter prep (transpose + bf16 cast) — outside the forward path.
    w_t, b2 = prepare_classifier_params(cls_w, cls_b)

    # Forward pass.
    feats = fake_encode_text(token_ids, embed_table, proj_w)   # (B, H) bf16
    logits = classifier_forward(feats, w_t, b2)                # (B, L) f32 via Pallas
    logits = jax.block_until_ready(logits)

    # Reference check: f32 matmul on the same bf16 feats against the original
    # f32 weights (bf16 weight cast -> loosened tolerance).
    ref = feats.astype(jnp.float32) @ cls_w.T + cls_b
    assert logits.shape == (B, L)
    assert jnp.allclose(logits, ref, atol=2e-3, rtol=2e-2), "mismatch vs reference"

    print("KERNEL_OK")
</pallas_src>

<mosaic_0001>
module attributes {stable_mosaic.version = 11 : i64} {
  func.func @classifier_kernel(%arg0: i32, %arg1: memref<8x256xbf16, #tpu.memory_space<vmem>>, %arg2: memref<256x2xbf16, #tpu.memory_space<vmem>>, %arg3: memref<1x2xf32, #tpu.memory_space<vmem>>, %arg4: memref<8x2xf32, #tpu.memory_space<vmem>>) attributes {dimension_semantics = [#tpu.dimension_semantics<parallel>], iteration_bounds = array<i64: 1>, scalar_prefetch = 0 : i64, scratch_operands = 0 : i64, tpu.core_type = #tpu.core_type<tc>, window_params = [{transform_indices = @transform_0, window_bounds = array<i64: 8, 256>}, {pipeline_mode = #tpu.pipeline_mode<synchronous>, transform_indices = @transform_1, window_bounds = array<i64: 256, 2>}, {pipeline_mode = #tpu.pipeline_mode<synchronous>, transform_indices = @transform_2, window_bounds = array<i64: 1, 2>}, {transform_indices = @transform_3, window_bounds = array<i64: 8, 2>}]} {
    %c0 = arith.constant 0 : index
    %c0_0 = arith.constant 0 : index
    %0 = vector.load %arg1[%c0, %c0_0] : memref<8x256xbf16, #tpu.memory_space<vmem>>, vector<8x256xbf16>
    %c0_1 = arith.constant 0 : index
    %c0_2 = arith.constant 0 : index
    %1 = vector.load %arg2[%c0_1, %c0_2] : memref<256x2xbf16, #tpu.memory_space<vmem>>, vector<256x2xbf16>
    %cst = arith.constant dense<0.000000e+00> : vector<8x2xf32>
    %2 = tpu.matmul %0, %1, %cst {dimension_numbers = #tpu.dot_dimension_numbers<[1], [0], [0], [1], [0, 0, 1, 1], [], []>} : vector<8x256xbf16>, vector<256x2xbf16>, vector<8x2xf32> -> vector<8x2xf32>
    %c0_3 = arith.constant 0 : index
    %c0_4 = arith.constant 0 : index
    %3 = vector.load %arg3[%c0_3, %c0_4] : memref<1x2xf32, #tpu.memory_space<vmem>>, vector<1x2xf32>
    %4 = vector.broadcast %3 : vector<1x2xf32> to vector<8x2xf32>
    %5 = arith.addf %2, %4 : vector<8x2xf32>
    %c0_5 = arith.constant 0 : index
    %c0_6 = arith.constant 0 : index
    %6 = vector.load %arg4[%c0_5, %c0_6] : memref<8x2xf32, #tpu.memory_space<vmem>>, vector<8x2xf32>
    tpu.vector_store %arg4[%c0_5, %c0_6], %5 {strides = array<i32>} : memref<8x2xf32, #tpu.memory_space<vmem>>, vector<8x2xf32>,
    return
  }
  func.func @transform_0(%arg0: i32) -> (i32, i32) {
    %c0_i32 = arith.constant 0 : i32
    %c0_i32_0 = arith.constant 0 : i32
    return %arg0, %c0_i32 : i32, i32
  }
  func.func @transform_1(%arg0: i32) -> (i32, i32) {
    %c0_i32 = arith.constant 0 : i32
    %c0_i32_0 = arith.constant 0 : i32
    %c0_i32_1 = arith.constant 0 : i32
    return %c0_i32, %c0_i32_0 : i32, i32
  }
  func.func @transform_2(%arg0: i32) -> (i32, i32) {
    %c0_i32 = arith.constant 0 : i32
    %c0_i32_0 = arith.constant 0 : i32
    %c0_i32_1 = arith.constant 0 : i32
    return %c0_i32, %c0_i32_0 : i32, i32
  }
  func.func @transform_3(%arg0: i32) -> (i32, i32) {
    %c0_i32 = arith.constant 0 : i32
    %c0_i32_0 = arith.constant 0 : i32
    return %arg0, %c0_i32 : i32, i32
  }
}

</mosaic_0001>

<llo_original>
// kernel: tpu_custom_call.1
$region0: #{tpu_custom_call.1}
  #allocation0 [shape = 'u32[]', space=smem, size = 0x4, offset = 0x4, fixed_abs, tag = 'smem constant byte address 0x4 - core index']
  #allocation1 [shape = 'u32[144,128]{1,0:T(1,128)}', space=vmem, size = 0x12000, scoped, tag = 'internal scratch']
  %s0 = inlined_call_operand.vmem [shape: bf16[8,256], index: 0, kind: input, shape index: {}]
  %s1 = inlined_call_operand.vmem [shape: bf16[256,2], index: 1, kind: input, shape index: {}]
  %s2 = inlined_call_operand.vmem [shape: f32[1,2], index: 2, kind: input, shape index: {}]
  %s3 = inlined_call_operand.vmem [shape: f32[8,2], index: 3, kind: output, shape index: {}]
  %s4 = sld [smem:[#allocation0]]
  $region22: #{tpu_custom_call.1} parent=0
    _
  %s6 = ssub.s32 1, %s4
  %s7 = scalar_select 0, %s6, %s4
  // Predicated region
  $region2: #{tpu_custom_call.1} parent=0 // pred_check
    _
  $region3: #{tpu_custom_call.1} parent=0 // pred_check_branch
    %9 = sbr.rel (0) target = $region5
  $region4: #{tpu_custom_call.1} parent=0 // pred_region
    _
  $region5: #{tpu_custom_call.1} parent=0 // pred_fallthru
    _
  // Predicated region
  $region6: #{tpu_custom_call.1} parent=0 // pred_check
    _
  $region7: #{tpu_custom_call.1} parent=0 // pred_check_branch
    %11 = sbr.rel (0) target = $region9
  $region8: #{tpu_custom_call.1} parent=0 // pred_region
    _
  $region9: #{tpu_custom_call.1} parent=0 // pred_fallthru
    _
  // Predicated region
  $region10: #{tpu_custom_call.1} parent=0 // pred_check
    _
  $region11: #{tpu_custom_call.1} parent=0 // pred_check_branch
    %13 = sbr.rel (0) target = $region13
  $region12: #{tpu_custom_call.1} parent=0 // pred_region
    _
  $region13: #{tpu_custom_call.1} parent=0 // pred_fallthru
    _
  %v15 = vld [vmem:[%s0] sm:$0xff]
  %v16 = vld [vmem:[%s1] sm:$0xf]
  %v17 = vld [vmem:[%s1 + $0x4] sm:$0xf]
  %v18 = vld [vmem:[%s1 + $0x8] sm:$0xf]
  %v19 = vld [vmem:[%s1 + $0xc] sm:$0xf]
  %v20 = vld [vmem:[%s1 + $0x10] sm:$0xf]
  %v21 = vld [vmem:[%s1 + $0x14] sm:$0xf]
  %v22 = vld [vmem:[%s1 + $0x18] sm:$0xf]
  %v23 = vld [vmem:[%s1 + $0x1c] sm:$0xf]
  %v24 = vld [vmem:[%s1 + $0x20] sm:$0xf]
  %v25 = vld [vmem:[%s1 + $0x24] sm:$0xf]
  %v26 = vld [vmem:[%s1 + $0x28] sm:$0xf]
  %v27 = vld [vmem:[%s1 + $0x2c] sm:$0xf]
  %v28 = vld [vmem:[%s1 + $0x30] sm:$0xf]
  %v29 = vld [vmem:[%s1 + $0x34] sm:$0xf]
  %v30 = vld [vmem:[%s1 + $0x38] sm:$0xf]
  %v31 = vld [vmem:[%s1 + $0x3c] sm:$0xf]
  %v32 = vld [vmem:[%s1 + $0x40] sm:$0xf]
  %v33 = vld [vmem:[%s1 + $0x44] sm:$0xf]
  %v34 = vld [vmem:[%s1 + $0x48] sm:$0xf]
  %v35 = vld [vmem:[%s1 + $0x4c] sm:$0xf]
  %v36 = vld [vmem:[%s1 + $0x50] sm:$0xf]
  %v37 = vld [vmem:[%s1 + $0x54] sm:$0xf]
  %v38 = vld [vmem:[%s1 + $0x58] sm:$0xf]
  %v39 = vld [vmem:[%s1 + $0x5c] sm:$0xf]
  %v40 = vld [vmem:[%s1 + $0x60] sm:$0xf]
  %v41 = vld [vmem:[%s1 + $0x64] sm:$0xf]
  %v42 = vld [vmem:[%s1 + $0x68] sm:$0xf]
  %v43 = vld [vmem:[%s1 + $0x6c] sm:$0xf]
  %v44 = vld [vmem:[%s1 + $0x70] sm:$0xf]
  %v45 = vld [vmem:[%s1 + $0x74] sm:$0xf]
  %v46 = vld [vmem:[%s1 + $0x78] sm:$0xf]
  %v47 = vld [vmem:[%s1 + $0x7c] sm:$0xf]
  %v48 = vld [vmem:[%s2] sm:$0x1]
  %v50 = vlaneseq
  %v51 = vshrl.u32 %v50, 7
  %v52 = vsub.s32 0, %v51
  %v53 = vrot.slane %v48, %v52
  %v56 = vunpack.c.l.b16 %v15
  %v57 = vunpack.c.h.b16 %v15
  %v58 = vpack.c.b16 %v56, %v56
  %v59 = vpack.c.b16 %v57, %v57
  %v94 = vunpack.c.l.b16 %v16
  %v95 = vunpack.c.l.b16 %v17
  %v96 = vunpack.c.l.b16 %v18
  %v97 = vunpack.c.l.b16 %v19
  %v98 = vunpack.c.l.b16 %v20
  %v99 = vunpack.c.l.b16 %v21
  %v100 = vunpack.c.l.b16 %v22
  %v101 = vunpack.c.l.b16 %v23
  %v102 = vunpack.c.l.b16 %v24
  %v103 = vunpack.c.l.b16 %v25
  %v104 = vunpack.c.l.b16 %v26
  %v105 = vunpack.c.l.b16 %v27
  %v106 = vunpack.c.l.b16 %v28
  %v107 = vunpack.c.l.b16 %v29
  %v108 = vunpack.c.l.b16 %v30
  %v109 = vunpack.c.l.b16 %v31
  %v110 = vunpack.c.l.b16 %v32
  %v111 = vunpack.c.l.b16 %v33
  %v112 = vunpack.c.l.b16 %v34
  %v113 = vunpack.c.l.b16 %v35
  %v114 = vunpack.c.l.b16 %v36
  %v115 = vunpack.c.l.b16 %v37
  %v116 = vunpack.c.l.b16 %v38
  %v117 = vunpack.c.l.b16 %v39
  %v118 = vunpack.c.l.b16 %v40
  %v119 = vunpack.c.l.b16 %v41
  %v120 = vunpack.c.l.b16 %v42
  %v121 = vunpack.c.l.b16 %v43
  %v122 = vunpack.c.l.b16 %v44
  %v123 = vunpack.c.l.b16 %v45
  %v124 = vunpack.c.l.b16 %v46
  %v125 = vunpack.c.l.b16 %v47
  %v126 = vpack.c.b16 %v95, %v94
  %v127 = vpack.c.b16 %v97, %v96
  %v128 = vpack.c.b16 %v99, %v98
  %v129 = vpack.c.b16 %v101, %v100
  %v130 = vpack.c.b16 %v103, %v102
  %v131 = vpack.c.b16 %v105, %v104
  %v132 = vpack.c.b16 %v107, %v106
  %v133 = vpack.c.b16 %v109, %v108
  %v134 = vpack.c.b16 %v111, %v110
  %v135 = vpack.c.b16 %v113, %v112
  %v136 = vpack.c.b16 %v115, %v114
  %v137 = vpack.c.b16 %v117, %v116
  %v138 = vpack.c.b16 %v119, %v118
  %v139 = vpack.c.b16 %v121, %v120
  %v140 = vpack.c.b16 %v123, %v122
  %v141 = vpack.c.b16 %v125, %v124
  %158 = vmatprep.subr.bf16.mxu0 0
  %159 = vmatpush1.bf16.msra.mxu0 %v126
  %160 = vmatprep.subr.bf16.mxu0 0
  %161 = vmatpush1.bf16.msra.mxu0 %v127
  %162 = vmatprep.subr.bf16.mxu0 0
  %163 = vmatpush1.bf16.msra.mxu0 %v128
  %164 = vmatprep.subr.bf16.mxu0 0
  %165 = vmatpush1.bf16.msra.mxu0 %v129
  %166 = vmatprep.subr.bf16.mxu0 0
  %167 = vmatpush1.bf16.msra.mxu0 %v130
  %168 = vmatprep.subr.bf16.mxu0 0
  %169 = vmatpush1.bf16.msra.mxu0 %v131
  %170 = vmatprep.subr.bf16.mxu0 0
  %171 = vmatpush1.bf16.msra.mxu0 %v132
  %172 = vmatprep.subr.bf16.mxu0 0
  %173 = vmatpush1.bf16.msra.mxu0 %v133
  %174 = vmatprep.subr.bf16.mxu0 0
  %175 = vmatpush1.bf16.msra.mxu0 %v134
  %176 = vmatprep.subr.bf16.mxu0 0
  %177 = vmatpush1.bf16.msra.mxu0 %v135
  %178 = vmatprep.subr.bf16.mxu0 0
  %179 = vmatpush1.bf16.msra.mxu0 %v136
  %180 = vmatprep.subr.bf16.mxu0 0
  %181 = vmatpush1.bf16.msra.mxu0 %v137
  %182 = vmatprep.subr.bf16.mxu0 0
  %183 = vmatpush1.bf16.msra.mxu0 %v138
  %184 = vmatprep.subr.bf16.mxu0 0
  %185 = vmatpush1.bf16.msra.mxu0 %v139
  %186 = vmatprep.subr.bf16.mxu0 0
  %187 = vmatpush1.bf16.msra.mxu0 %v140
  %188 = vmatprep.subr.bf16.mxu0 0
  %189 = vmatpush1.bf16.msra.mxu0 %v141
  %190 = vmatprep.mubr.bf16.mxu0 %v59
  %191 = vmatmul.mubr.bf16.gmra.mrb[0].mxu0 %v58
  %v192 = vpop.f32.mrb[0].mxu0
  %v193 = vadd.f32 %v53, %v192
  %v194 = vpop.f32.mrb[0].mxu0
  %v195 = vpop.f32.mrb[0].mxu0
  %v196 = vpop.f32.mrb[0].mxu0
  %197 = vdwg.mxu0
  %vm198 = vcmask 15360
  %199 = vst.msk [vmem:[%s3] sm:$0xff] %vm198, %v193
  // Predicated region
  $region14: #{tpu_custom_call.1} parent=0 // pred_check
    _
  $region15: #{tpu_custom_call.1} parent=0 // pred_check_branch
    %201 = sbr.rel (0) target = $region17
  $region16: #{tpu_custom_call.1} parent=0 // pred_region
    _
  $region17: #{tpu_custom_call.1} parent=0 // pred_fallthru
    _
  // Predicated region
  $region18: #{tpu_custom_call.1} parent=0 // pred_check
    _
  $region19: #{tpu_custom_call.1} parent=0 // pred_check_branch
    %203 = sbr.rel (0) target = $region21
  $region20: #{tpu_custom_call.1} parent=0 // pred_region
    _
  $region21: #{tpu_custom_call.1} parent=0 // pred_fallthru
    _

</llo_original>
